<compile_context>
chip_gen: v5e
topology: v5e:2x2
jax: 0.10.0
libtpu: 0.0.40
codegen_flags: <defaults>
</compile_context>

<pallas_src>
import functools
import math

import jax
import jax.numpy as jnp
import numpy as np
from jax.experimental import pallas as pl
from jax.experimental.pallas import tpu as pltpu

_MASK_VALUE = -9e15  # matches the PyTorch reference's zero_vec


def _round_up(x, m):
    return ((x + m - 1) // m) * m


def _gat_kernel(e1_ref, e2_ref, mask_ref, wh_ref, out_ref,
                m_ref, l_ref, acc_ref, *,
                alpha, concat, mask_is_bias, approx_recip):
    j = pl.program_id(1)

    @pl.when(j == 0)
    def _():
        m_ref[...] = jnp.full_like(m_ref, -jnp.inf)
        l_ref[...] = jnp.zeros_like(l_ref)
        acc_ref[...] = jnp.zeros_like(acc_ref)

    # Raw attention logits for this (query tile, key tile): outer sum, no transpose.
    e = e1_ref[...] + e2_ref[...]                       # (TQ, TK) f32
    e = jnp.where(e > 0, e, alpha * e)                  # LeakyReLU(negative_slope=alpha)

    if mask_is_bias:
        # Additive mask: 0 on edges, -9e15 elsewhere -> single add (no cmp/select).
        e = e + mask_ref[...].astype(jnp.float32)
    else:
        # int8 adjacency: compare packed int8 directly (no i32 upconvert).
        e = jnp.where(mask_ref[...] != 0, e, _MASK_VALUE)

    # ---- online softmax; normalization deferred until after the MXU ----
    m_prev = m_ref[...]
    m_new = jnp.maximum(m_prev, jnp.max(e, axis=1, keepdims=True))
    corr = jnp.exp(m_prev - m_new)                      # rescale of previous partials
    p = jnp.exp(e - m_new)                              # un-normalized probabilities

    l_ref[...] = corr * l_ref[...] + jnp.sum(p, axis=1, keepdims=True)
    acc_ref[...] = corr * acc_ref[...] + jnp.dot(
        p.astype(wh_ref.dtype), wh_ref[...], preferred_element_type=jnp.float32)
    m_ref[...] = m_new

    @pl.when(j == pl.num_programs(1) - 1)
    def _():
        l = l_ref[...]
        inv = pl.reciprocal(l, approx=True) if approx_recip else 1.0 / l
        h_prime = acc_ref[...] * inv                    # deferred softmax normalization
        if concat:
            # ELU(alpha=1); clamp so the unselected branch never sees large positives.
            h_prime = jnp.where(h_prime > 0, h_prime,
                                jnp.exp(jnp.minimum(h_prime, 0.0)) - 1.0)
        out_ref[...] = h_prime.astype(out_ref.dtype)


def gat_layer(h, adj, W, a, *, alpha, concat=True,
              block_q=256, block_k=256,
              mxu_dtype=jnp.bfloat16, mask_is_bias=True, approx_recip=None):
    """Pallas forward of GraphAttentionLayer (eval-mode dropout).

    block_q: query tile (multiple of 32; 256 fills the v6e/v7x MXU, use 128 on v5e).
    block_k: key tile (multiple of 128).
    mask_is_bias: True -> stream a bf16 additive bias (best when VALU-bound,
                  v6e/v7x); False -> stream an int8 adjacency mask (best when
                  HBM-bound, v5e).
    """
    N = h.shape[0]
    f_out = W.shape[1]

    # ---- one-time precompute (tiny matmuls, done once, not per tile) ----
    wh = jnp.dot(h.astype(jnp.float32), W.astype(jnp.float32))         # (N, Fout)
    e1 = jnp.dot(wh, a[:f_out, :].astype(jnp.float32))                 # (N, 1)
    e2 = jnp.dot(wh, a[f_out:, :].astype(jnp.float32)).reshape(1, N)   # (1, N) lane-major

    if approx_recip is None:
        approx_recip = jnp.dtype(mxu_dtype) != jnp.dtype(jnp.float32)

    # ---- padding for lane-dense layouts and even tiling ----
    f_pad = _round_up(f_out, 128)

    # Query tiles: multiple of 32, and at least 2 tiles so both v7x TCs get work.
    tq = min(block_q, max(32, _round_up((N + 1) // 2, 32)))
    n_qpad = max(_round_up(N, tq), 2 * tq)

    # Key tiles: multiple of 128 (lane-dense adj/e2 loads, aligned MXU K dim).
    tk = min(block_k, _round_up(N, 128))
    n_kpad = _round_up(N, tk)

    wh_mxu = (jnp.zeros((n_kpad, f_pad), jnp.float32)
              .at[:N, :f_out].set(wh).astype(mxu_dtype))
    e1_p = jnp.zeros((n_qpad, 1), jnp.float32).at[:N, :].set(e1)
    e2_p = jnp.zeros((1, n_kpad), jnp.float32).at[:, :N].set(e2)

    edge = adj > 0
    if mask_is_bias:
        # Additive bias (bf16): 0 on edges, -9e15 elsewhere; padded keys stay masked.
        mask_arr = jnp.full((n_qpad, n_kpad), _MASK_VALUE, jnp.float32)
        mask_arr = mask_arr.at[:N, :N].set(jnp.where(edge, 0.0, _MASK_VALUE))
        mask_arr = mask_arr.astype(jnp.bfloat16)
    else:
        # 1-byte adjacency; padded keys are 0 and therefore masked in-kernel.
        mask_arr = (jnp.zeros((n_qpad, n_kpad), jnp.int8)
                    .at[:N, :N].set(edge.astype(jnp.int8)))

    # ---- explicit VMEM budget, clamped by the chip's actual VMEM capacity ----
    mxu_bytes = jnp.dtype(mxu_dtype).itemsize
    mask_bytes = jnp.dtype(mask_arr.dtype).itemsize
    per_step_in = (tq * 4 + tk * 4 + tq * tk * mask_bytes + tk * f_pad * mxu_bytes)
    vmem_bytes = (2 * per_step_in                  # double-buffered input blocks
                  + 2 * tq * f_pad * 4             # double-buffered output block
                  + tq * f_pad * 4 + 2 * tq * 4    # scratch: acc, m, l
                  + 6 * tq * tk * 4                # live f32 score-tile intermediates
                  + (16 << 20))                    # compiler scratch / headroom
    try:
        chip_vmem = pltpu.get_tpu_info().vmem_capacity_bytes
    except Exception:
        chip_vmem = 64 * 1024 * 1024               # conservative (v7x per-TC) fallback
    vmem_limit = int(min(max(vmem_bytes, 32 << 20), chip_vmem - (4 << 20)))

    kernel = functools.partial(_gat_kernel, alpha=alpha, concat=concat,
                               mask_is_bias=mask_is_bias, approx_recip=approx_recip)

    out = pl.pallas_call(
        kernel,
        out_shape=jax.ShapeDtypeStruct((n_qpad, f_pad), jnp.float32),
        grid=(n_qpad // tq, n_kpad // tk),
        in_specs=[
            pl.BlockSpec((tq, 1), lambda i, j: (i, 0)),        # e1 (per query tile)
            pl.BlockSpec((1, tk), lambda i, j: (0, j)),        # e2 (per key tile)
            pl.BlockSpec((tq, tk), lambda i, j: (i, j)),       # mask / bias slab
            pl.BlockSpec((tk, f_pad), lambda i, j: (j, 0)),    # Wh key tile
        ],
        out_specs=pl.BlockSpec((tq, f_pad), lambda i, j: (i, 0)),
        scratch_shapes=[
            pltpu.VMEM((tq, 1), jnp.float32),      # running max
            pltpu.VMEM((tq, 1), jnp.float32),      # running sum
            pltpu.VMEM((tq, f_pad), jnp.float32),  # un-normalized accumulator
        ],
        compiler_params=pltpu.CompilerParams(
            dimension_semantics=("parallel", "arbitrary"),
            vmem_limit_bytes=vmem_limit,
        ),
    )(e1_p, e2_p, mask_arr, wh_mxu)

    return out[:N, :f_out]


def _xavier_uniform(key, shape, gain):
    fan_in, fan_out = shape
    bound = gain * math.sqrt(6.0 / (fan_in + fan_out))
    return jax.random.uniform(key, shape, jnp.float32, minval=-bound, maxval=bound)


def _reference(h, adj, W, a, alpha, concat=True):
    # Pure-JAX f32 reference mirroring the PyTorch forward (eval mode).
    wh = h @ W
    f_out = W.shape[1]
    e = wh @ a[:f_out, :] + (wh @ a[f_out:, :]).T
    e = jnp.where(e > 0, e, alpha * e)
    e = jnp.where(adj > 0, e, _MASK_VALUE)
    att = jax.nn.softmax(e, axis=1)
    h_prime = att @ wh
    return jax.nn.elu(h_prime) if concat else h_prime


if __name__ == "__main__":
    # Small synthetic problem: N=8 nodes, in_features=16, out_features=32.
    N, in_features, out_features = 8, 16, 32
    alpha = 0.2      # LeakyReLU negative slope
    dropout = 0.6    # unused: eval-mode (identity) dropout

    key = jax.random.PRNGKey(0)
    k_h, k_adj, k_w, k_a = jax.random.split(key, 4)

    h = jax.random.normal(k_h, (N, in_features), jnp.float32)
    # random sparse-ish adjacency with self loops
    adj = (jax.random.uniform(k_adj, (N, N)) > 0.5).astype(jnp.float32)
    adj = jnp.maximum(adj, jnp.eye(N, dtype=jnp.float32))

    W = _xavier_uniform(k_w, (in_features, out_features), gain=1.414)
    a = _xavier_uniform(k_a, (2 * out_features, 1), gain=1.414)

    ref = _reference(h, adj, W, a, alpha, concat=True)

    # Default fast path: bf16 MXU inputs, bf16 additive mask, approx reciprocal.
    out_fast = jax.block_until_ready(gat_layer(h, adj, W, a, alpha=alpha, concat=True))
    np.testing.assert_allclose(np.asarray(out_fast), np.asarray(ref),
                               rtol=5e-2, atol=5e-2)

    # f32 MXU + exact reciprocal + int8 adjacency path: tighter check of kernel math.
    out_f32 = jax.block_until_ready(
        gat_layer(h, adj, W, a, alpha=alpha, concat=True,
                  mxu_dtype=jnp.float32, mask_is_bias=False))
    np.testing.assert_allclose(np.asarray(out_f32), np.asarray(ref),
                               rtol=2e-2, atol=2e-2)

    print("KERNEL_OK")
</pallas_src>

<mosaic_0001>
module attributes {stable_mosaic.version = 11 : i64} {
  func.func @_gat_kernel(%arg0: i32, %arg1: i32, %arg2: memref<32x1xf32, #tpu.memory_space<vmem>>, %arg3: memref<1x128xf32, #tpu.memory_space<vmem>>, %arg4: memref<32x128xbf16, #tpu.memory_space<vmem>>, %arg5: memref<128x128xbf16, #tpu.memory_space<vmem>>, %arg6: memref<32x128xf32, #tpu.memory_space<vmem>>, %arg7: memref<32x1xf32, #tpu.memory_space<vmem>>, %arg8: memref<32x1xf32, #tpu.memory_space<vmem>>, %arg9: memref<32x128xf32, #tpu.memory_space<vmem>>) attributes {dimension_semantics = [#tpu.dimension_semantics<parallel>, #tpu.dimension_semantics<arbitrary>], iteration_bounds = array<i64: 2, 1>, scalar_prefetch = 0 : i64, scratch_operands = 3 : i64, tpu.core_type = #tpu.core_type<tc>, window_params = [{transform_indices = @transform_0, window_bounds = array<i64: 32, 1>}, {transform_indices = @transform_1, window_bounds = array<i64: 1, 128>}, {transform_indices = @transform_2, window_bounds = array<i64: 32, 128>}, {transform_indices = @transform_3, window_bounds = array<i64: 128, 128>}, {transform_indices = @transform_4, window_bounds = array<i64: 32, 128>}]} {
    %c0_i32 = arith.constant 0 : i32
    %0 = arith.cmpi eq, %arg1, %c0_i32 : i32
    %1 = arith.extui %0 : i1 to i32
    %c0_i32_0 = arith.constant 0 : i32
    %2 = arith.cmpi ne, %1, %c0_i32_0 : i32
    scf.if %2 {
      %cst_26 = arith.constant 0xFF800000 : f32
      %43 = vector.broadcast %cst_26 : f32 to vector<32x1xf32>
      %c0_27 = arith.constant 0 : index
      %c0_28 = arith.constant 0 : index
      %44 = vector.load %arg7[%c0_27, %c0_28] : memref<32x1xf32, #tpu.memory_space<vmem>>, vector<32x1xf32>
      tpu.vector_store %arg7[%c0_27, %c0_28], %43 {strides = array<i32>} : memref<32x1xf32, #tpu.memory_space<vmem>>, vector<32x1xf32>,
      %cst_29 = arith.constant 0.000000e+00 : f32
      %45 = vector.broadcast %cst_29 : f32 to vector<32x1xf32>
      %c0_30 = arith.constant 0 : index
      %c0_31 = arith.constant 0 : index
      %46 = vector.load %arg8[%c0_30, %c0_31] : memref<32x1xf32, #tpu.memory_space<vmem>>, vector<32x1xf32>
      tpu.vector_store %arg8[%c0_30, %c0_31], %45 {strides = array<i32>} : memref<32x1xf32, #tpu.memory_space<vmem>>, vector<32x1xf32>,
      %cst_32 = arith.constant 0.000000e+00 : f32
      %47 = vector.broadcast %cst_32 : f32 to vector<32x128xf32>
      %c0_33 = arith.constant 0 : index
      %c0_34 = arith.constant 0 : index
      %48 = vector.load %arg9[%c0_33, %c0_34] : memref<32x128xf32, #tpu.memory_space<vmem>>, vector<32x128xf32>
      tpu.vector_store %arg9[%c0_33, %c0_34], %47 {strides = array<i32>} : memref<32x128xf32, #tpu.memory_space<vmem>>, vector<32x128xf32>,
    } else {
    }
    %c0 = arith.constant 0 : index
    %c0_1 = arith.constant 0 : index
    %3 = vector.load %arg2[%c0, %c0_1] : memref<32x1xf32, #tpu.memory_space<vmem>>, vector<32x1xf32>
    %c0_2 = arith.constant 0 : index
    %c0_3 = arith.constant 0 : index
    %4 = vector.load %arg3[%c0_2, %c0_3] : memref<1x128xf32, #tpu.memory_space<vmem>>, vector<1x128xf32>
    %5 = vector.broadcast %3 : vector<32x1xf32> to vector<32x128xf32>
    %6 = vector.broadcast %4 : vector<1x128xf32> to vector<32x128xf32>
    %7 = arith.addf %5, %6 : vector<32x128xf32>
    %cst = arith.constant 0.000000e+00 : f32
    %8 = vector.broadcast %cst : f32 to vector<32x128xf32>
    %9 = arith.cmpf ogt, %7, %8 : vector<32x128xf32>
    %cst_4 = arith.constant 2.000000e-01 : f32
    %10 = vector.broadcast %cst_4 : f32 to vector<32x128xf32>
    %11 = arith.mulf %10, %7 : vector<32x128xf32>
    %12 = arith.select %9, %7, %11 : vector<32x128xi1>, vector<32x128xf32>
    %c0_5 = arith.constant 0 : index
    %c0_6 = arith.constant 0 : index
    %13 = vector.load %arg4[%c0_5, %c0_6] : memref<32x128xbf16, #tpu.memory_space<vmem>>, vector<32x128xbf16>
    %14 = arith.extf %13 : vector<32x128xbf16> to vector<32x128xf32>
    %15 = arith.addf %12, %14 : vector<32x128xf32>
    %c0_7 = arith.constant 0 : index
    %c0_8 = arith.constant 0 : index
    %16 = vector.load %arg7[%c0_7, %c0_8] : memref<32x1xf32, #tpu.memory_space<vmem>>, vector<32x1xf32>
    %cst_9 = arith.constant dense<0xFF800000> : vector<32xf32>
    %17 = vector.multi_reduction <maximumf>, %15, %cst_9 [1] : vector<32x128xf32> to vector<32xf32>
    %18 = vector.shape_cast %17 : vector<32xf32> to vector<32x1xf32>
    %19 = arith.maximumf %16, %18 : vector<32x1xf32>
    %20 = arith.subf %16, %19 : vector<32x1xf32>
    %21 = math.exp %20 : vector<32x1xf32>
    %22 = vector.broadcast %19 : vector<32x1xf32> to vector<32x128xf32>
    %23 = arith.subf %15, %22 : vector<32x128xf32>
    %24 = math.exp %23 : vector<32x128xf32>
    %c0_10 = arith.constant 0 : index
    %c0_11 = arith.constant 0 : index
    %25 = vector.load %arg8[%c0_10, %c0_11] : memref<32x1xf32, #tpu.memory_space<vmem>>, vector<32x1xf32>
    %26 = arith.mulf %21, %25 : vector<32x1xf32>
    %cst_12 = arith.constant dense<0.000000e+00> : vector<32xf32>
    %27 = vector.multi_reduction <add>, %24, %cst_12 [1] : vector<32x128xf32> to vector<32xf32>
    %28 = vector.shape_cast %27 : vector<32xf32> to vector<32x1xf32>
    %29 = arith.addf %26, %28 : vector<32x1xf32>
    %c0_13 = arith.constant 0 : index
    %c0_14 = arith.constant 0 : index
    %30 = vector.load %arg8[%c0_13, %c0_14] : memref<32x1xf32, #tpu.memory_space<vmem>>, vector<32x1xf32>
    tpu.vector_store %arg8[%c0_13, %c0_14], %29 {strides = array<i32>} : memref<32x1xf32, #tpu.memory_space<vmem>>, vector<32x1xf32>,
    %c0_15 = arith.constant 0 : index
    %c0_16 = arith.constant 0 : index
    %31 = vector.load %arg9[%c0_15, %c0_16] : memref<32x128xf32, #tpu.memory_space<vmem>>, vector<32x128xf32>
    %32 = vector.broadcast %21 : vector<32x1xf32> to vector<32x128xf32>
    %33 = arith.mulf %32, %31 : vector<32x128xf32>
    %34 = arith.truncf %24 : vector<32x128xf32> to vector<32x128xbf16>
    %c0_17 = arith.constant 0 : index
    %c0_18 = arith.constant 0 : index
    %35 = vector.load %arg5[%c0_17, %c0_18] : memref<128x128xbf16, #tpu.memory_space<vmem>>, vector<128x128xbf16>
    %cst_19 = arith.constant dense<0.000000e+00> : vector<32x128xf32>
    %36 = tpu.matmul %34, %35, %cst_19 {dimension_numbers = #tpu.dot_dimension_numbers<[1], [0], [0], [1], [0, 0, 1, 1], [], []>} : vector<32x128xbf16>, vector<128x128xbf16>, vector<32x128xf32> -> vector<32x128xf32>
    %37 = arith.addf %33, %36 : vector<32x128xf32>
    %c0_20 = arith.constant 0 : index
    %c0_21 = arith.constant 0 : index
    %38 = vector.load %arg9[%c0_20, %c0_21] : memref<32x128xf32, #tpu.memory_space<vmem>>, vector<32x128xf32>
    tpu.vector_store %arg9[%c0_20, %c0_21], %37 {strides = array<i32>} : memref<32x128xf32, #tpu.memory_space<vmem>>, vector<32x128xf32>,
    %c0_22 = arith.constant 0 : index
    %c0_23 = arith.constant 0 : index
    %39 = vector.load %arg7[%c0_22, %c0_23] : memref<32x1xf32, #tpu.memory_space<vmem>>, vector<32x1xf32>
    tpu.vector_store %arg7[%c0_22, %c0_23], %19 {strides = array<i32>} : memref<32x1xf32, #tpu.memory_space<vmem>>, vector<32x1xf32>,
    %c0_i32_24 = arith.constant 0 : i32
    %40 = arith.cmpi eq, %arg1, %c0_i32_24 : i32
    %41 = arith.extui %40 : i1 to i32
    %c0_i32_25 = arith.constant 0 : i32
    %42 = arith.cmpi ne, %41, %c0_i32_25 : i32
    scf.if %42 {
      %c0_26 = arith.constant 0 : index
      %c0_27 = arith.constant 0 : index
      %43 = vector.load %arg8[%c0_26, %c0_27] : memref<32x1xf32, #tpu.memory_space<vmem>>, vector<32x1xf32>
      %44 = tpu.reciprocal %43 {approx = true} : vector<32x1xf32> -> vector<32x1xf32>
      %c0_28 = arith.constant 0 : index
      %c0_29 = arith.constant 0 : index
      %45 = vector.load %arg9[%c0_28, %c0_29] : memref<32x128xf32, #tpu.memory_space<vmem>>, vector<32x128xf32>
      %46 = vector.broadcast %44 : vector<32x1xf32> to vector<32x128xf32>
      %47 = arith.mulf %45, %46 : vector<32x128xf32>
      %cst_30 = arith.constant 0.000000e+00 : f32
      %48 = vector.broadcast %cst_30 : f32 to vector<32x128xf32>
      %49 = arith.cmpf ogt, %47, %48 : vector<32x128xf32>
      %cst_31 = arith.constant 0.000000e+00 : f32
      %50 = vector.broadcast %cst_31 : f32 to vector<32x128xf32>
      %51 = arith.minimumf %47, %50 : vector<32x128xf32>
      %52 = math.exp %51 : vector<32x128xf32>
      %cst_32 = arith.constant 1.000000e+00 : f32
      %53 = vector.broadcast %cst_32 : f32 to vector<32x128xf32>
      %54 = arith.subf %52, %53 : vector<32x128xf32>
      %55 = arith.select %49, %47, %54 : vector<32x128xi1>, vector<32x128xf32>
      %c0_33 = arith.constant 0 : index
      %c0_34 = arith.constant 0 : index
      %56 = vector.load %arg6[%c0_33, %c0_34] : memref<32x128xf32, #tpu.memory_space<vmem>>, vector<32x128xf32>
      tpu.vector_store %arg6[%c0_33, %c0_34], %55 {strides = array<i32>} : memref<32x128xf32, #tpu.memory_space<vmem>>, vector<32x128xf32>,
    } else {
    }
    return
  }
  func.func @transform_0(%arg0: i32, %arg1: i32) -> (i32, i32) {
    %c0_i32 = arith.constant 0 : i32
    %c0_i32_0 = arith.constant 0 : i32
    return %arg0, %c0_i32 : i32, i32
  }
  func.func @transform_1(%arg0: i32, %arg1: i32) -> (i32, i32) {
    %c0_i32 = arith.constant 0 : i32
    %c0_i32_0 = arith.constant 0 : i32
    return %c0_i32, %arg1 : i32, i32
  }
  func.func @transform_2(%arg0: i32, %arg1: i32) -> (i32, i32) {
    %c0_i32 = arith.constant 0 : i32
    return %arg0, %arg1 : i32, i32
  }
  func.func @transform_3(%arg0: i32, %arg1: i32) -> (i32, i32) {
    %c0_i32 = arith.constant 0 : i32
    %c0_i32_0 = arith.constant 0 : i32
    return %arg1, %c0_i32 : i32, i32
  }
  func.func @transform_4(%arg0: i32, %arg1: i32) -> (i32, i32) {
    %c0_i32 = arith.constant 0 : i32
    %c0_i32_0 = arith.constant 0 : i32
    return %arg0, %c0_i32 : i32, i32
  }
}

</mosaic_0001>

<llo_original>
// kernel: tpu_custom_call.1
$region0: #{tpu_custom_call.1}
  #allocation0 [shape = 'u32[]', space=smem, size = 0x4, offset = 0x4, fixed_abs, tag = 'smem constant byte address 0x4 - core index']
  #allocation1 [shape = 'u32[72,128]{1,0:T(1,128)}', space=vmem, size = 0x9000, scoped, tag = 'internal scratch']
  #allocation2 [shape = 'f32[32,1]{1,0:T(8,128)}', space=vmem, size = 0x4000, scoped, tag = 'scratch operand']
  #allocation3 [shape = 'f32[32,1]{1,0:T(8,128)}', space=vmem, size = 0x4000, scoped, tag = 'scratch operand']
  #allocation4 [shape = 'f32[32,128]{1,0:T(8,128)}', space=vmem, size = 0x4000, scoped, tag = 'scratch operand']
  %s0 = inlined_call_operand.vmem [shape: f32[64,1], index: 0, kind: input, shape index: {}]
  %s1 = inlined_call_operand.vmem [shape: f32[1,128], index: 1, kind: input, shape index: {}]
  %s2 = inlined_call_operand.hbm [shape: bf16[64,128], index: 2, kind: input, shape index: {}]
  %s3 = inlined_call_operand.vmem [shape: bf16[128,128], index: 3, kind: input, shape index: {}]
  %s4 = inlined_call_operand.hbm [shape: f32[64,128], index: 4, kind: output, shape index: {}]
  %s5 = sld [smem:[#allocation0]]
  $region61: #{tpu_custom_call.1} parent=0
    _
  %s7 = ssub.s32 1, %s5
  %s8 = scalar_select 0, %s7, %s5
  $region1: #{tpu_custom_call.1} parent=0
    #allocation5 [shape = 'u8[16384]{0}', space=vmem, size = 0x4000, scoped, tag = 'input window, operand 2']
    #allocation6 [shape = 's32[2]{0}', space=sflag, size = 0x8, scoped, tag = 'scoped memory for tpu_custom_call.1']
    #allocation7 [shape = 's32[2]{0}', space=sflag, size = 0x8, scoped, tag = 'scoped memory for tpu_custom_call.1']
    #allocation8 [shape = 'u8[32768]{0}', space=vmem, size = 0x8000, scoped, tag = 'output window, operand 0']
    %9 = vsyncpa [#allocation6], 0
    %s10 = scalar_lea.sflag [#allocation6], 1
    %11 = vsyncpa %s10, 0
    %12 = vsyncpa [#allocation7], 0
    %s13 = scalar_lea.sflag [#allocation7], 1
    %14 = vsyncpa %s13, 0
    loop: start=0, step=1, limit=4
    $region2: #{tpu_custom_call.1} parent=1 // loop_pre_header
      _
    $region3: #{tpu_custom_call.1} parent=1 // loop_header
      %s16 = sphi 0, %s20
      %p17 = scmp.ge.s32.totalorder %s16, 4
      %s23 = sphi 0, %s35
      %s24 = sphi 0, %s31
      %s25 = sphi 0, %s23
      %s26 = sphi 0, %s24
      %s27 = sphi 0, %s25
      %s28 = sphi 0, %s26
      %s38 = sphi 0, %s40
      %s41 = sphi 0, %s38
      %s42 = sphi 0, %s41
      %s58 = sphi 0, %s42
      %s64 = sphi 0, %s66
      %s67 = sphi 0, %s64
      %s68 = sphi 0, %s67
      %s84 = sphi 0, %s68
      %s92 = sphi 0, %s94
      %s95 = sphi 0, %s92
      %s96 = sphi 0, %s95
      %s112 = sphi 0, %s96
      %s118 = sphi 0, %s120
      %s121 = sphi 0, %s118
      %s122 = sphi 0, %s121
      %s138 = sphi 0, %s122
      %s144 = sphi 0, %s146
      %s147 = sphi 0, %s144
      %s148 = sphi 0, %s147
      %s164 = sphi 0, %s148
    $region4: #{tpu_custom_call.1} parent=1 // loop_header_branch
      %19 = sbr.rel (%p17) target = $region8
    $region5: #{tpu_custom_call.1} parent=1 // loop_body
      %s21 = ssub.s32 %s16, 1
      %s22 = ssub.s32 %s16, 2
      %s29 = sadd.s32 1, %s24
      %p30 = scmp.ge.s32.totalorder %s29, 1
      %s31 = scalar_select %p30, 0, %s29
      %s32 = sadd.s32 1, %s23
      %s33 = scalar_select %p30, %s32, %s23
      %p34 = scmp.ge.s32.totalorder %s33, 2
      %s35 = scalar_select %p34, 0, %s33
      %s36 = ssub.s32 %s23, %s35
      %p37 = scmp.eq.s32.totalorder %s36, 0
      %s39 = sadd.s32 %s38, 1
      %s40 = scalar_select %p37, %s38, %s39
      %p43 = pneg %p37
      %p44 = scmp.eq.s32.totalorder %s16, 1
      %p45 = por %p43, %p44
      %p46 = scmp.ne.s32.totalorder %s38, %s41
      %p47 = scmp.eq.s32.totalorder %s16, 0
      %p48 = por %p46, %p47
      %p49 = scmp.ne.s32.totalorder %s38, %s41
      %p50 = scmp.eq.s32.totalorder %s21, 1
      %p51 = por %p49, %p50
      %p52 = scmp.ne.s32.totalorder %s41, %s42
      %p53 = scmp.eq.s32.totalorder %s21, 0
      %p54 = por %p52, %p53
      %p55 = scmp.ne.s32.totalorder %s41, %s42
      %p56 = scmp.eq.s32.totalorder %s22, 1
      %p57 = por %p55, %p56
      %p59 = scmp.ne.s32.totalorder %s42, %s58
      %p60 = scmp.eq.s32.totalorder %s22, 0
      %p61 = por %p59, %p60
      %s62 = ssub.s32 %s24, %s31
      %p63 = scmp.eq.s32.totalorder %s62, 0
      %s65 = sadd.s32 %s64, 1
      %s66 = scalar_select %p63, %s64, %s65
      %p69 = pneg %p63
      %p70 = scmp.eq.s32.totalorder %s16, 1
      %p71 = por %p69, %p70
      %p72 = scmp.ne.s32.totalorder %s64, %s67
      %p73 = scmp.eq.s32.totalorder %s16, 0
      %p74 = por %p72, %p73
      %p75 = scmp.ne.s32.totalorder %s64, %s67
      %p76 = scmp.eq.s32.totalorder %s21, 1
      %p77 = por %p75, %p76
      %p78 = scmp.ne.s32.totalorder %s67, %s68
      %p79 = scmp.eq.s32.totalorder %s21, 0
      %p80 = por %p78, %p79
      %p81 = scmp.ne.s32.totalorder %s67, %s68
      %p82 = scmp.eq.s32.totalorder %s22, 1
      %p83 = por %p81, %p82
      %p85 = scmp.ne.s32.totalorder %s68, %s84
      %p86 = scmp.eq.s32.totalorder %s22, 0
      %p87 = por %p85, %p86
      %s88 = ssub.s32 %s23, %s35
      %s89 = ssub.s32 %s24, %s31
      %s90 = sor.u32 %s88, %s89
      %p91 = scmp.eq.s32.totalorder %s90, 0
      %s93 = sadd.s32 %s92, 1
      %s94 = scalar_select %p91, %s92, %s93
      %p97 = pneg %p91
      %p98 = scmp.eq.s32.totalorder %s16, 1
      %p99 = por %p97, %p98
      %p100 = scmp.ne.s32.totalorder %s92, %s95
      %p101 = scmp.eq.s32.totalorder %s16, 0
      %p102 = por %p100, %p101
      %p103 = scmp.ne.s32.totalorder %s92, %s95
      %p104 = scmp.eq.s32.totalorder %s21, 1
      %p105 = por %p103, %p104
      %p106 = scmp.ne.s32.totalorder %s95, %s96
      %p107 = scmp.eq.s32.totalorder %s21, 0
      %p108 = por %p106, %p107
      %p109 = scmp.ne.s32.totalorder %s95, %s96
      %p110 = scmp.eq.s32.totalorder %s22, 1
      %p111 = por %p109, %p110
      %p113 = scmp.ne.s32.totalorder %s96, %s112
      %p114 = scmp.eq.s32.totalorder %s22, 0
      %p115 = por %p113, %p114
      %s116 = ssub.s32 %s24, %s31
      %p117 = scmp.eq.s32.totalorder %s116, 0
      %s119 = sadd.s32 %s118, 1
      %s120 = scalar_select %p117, %s118, %s119
      %p123 = pneg %p117
      %p124 = scmp.eq.s32.totalorder %s16, 1
      %p125 = por %p123, %p124
      %p126 = scmp.ne.s32.totalorder %s118, %s121
      %p127 = scmp.eq.s32.totalorder %s16, 0
      %p128 = por %p126, %p127
      %p129 = scmp.ne.s32.totalorder %s118, %s121
      %p130 = scmp.eq.s32.totalorder %s21, 1
      %p131 = por %p129, %p130
      %p132 = scmp.ne.s32.totalorder %s121, %s122
      %p133 = scmp.eq.s32.totalorder %s21, 0
      %p134 = por %p132, %p133
      %p135 = scmp.ne.s32.totalorder %s121, %s122
      %p136 = scmp.eq.s32.totalorder %s22, 1
      %p137 = por %p135, %p136
      %p139 = scmp.ne.s32.totalorder %s122, %s138
      %p140 = scmp.eq.s32.totalorder %s22, 0
      %p141 = por %p139, %p140
      %s142 = ssub.s32 %s23, %s35
      %p143 = scmp.eq.s32.totalorder %s142, 0
      %s145 = sadd.s32 %s144, 1
      %s146 = scalar_select %p143, %s144, %s145
      %p149 = pneg %p143
      %p150 = scmp.eq.s32.totalorder %s16, 1
      %p151 = por %p149, %p150
      %p152 = scmp.ne.s32.totalorder %s144, %s147
      %p153 = scmp.eq.s32.totalorder %s16, 0
      %p154 = por %p152, %p153
      %p155 = scmp.ne.s32.totalorder %s144, %s147
      %p156 = scmp.eq.s32.totalorder %s21, 1
      %p157 = por %p155, %p156
      %p158 = scmp.ne.s32.totalorder %s147, %s148
      %p159 = scmp.eq.s32.totalorder %s21, 0
      %p160 = por %p158, %p159
      %p161 = scmp.ne.s32.totalorder %s147, %s148
      %p162 = scmp.eq.s32.totalorder %s22, 1
      %p163 = por %p161, %p162
      %p165 = scmp.ne.s32.totalorder %s148, %s164
      %p166 = scmp.eq.s32.totalorder %s22, 0
      %p167 = por %p165, %p166
      %p168 = scmp.le.s32.totalorder 1, %s16
      %p169 = scmp.lt.s32.totalorder %s16, 3
      %p170 = pnand %p168, %p169
      %p171 = pneg %p170
      // Predicated region
      $region9: #{tpu_custom_call.1} parent=5 // pred_check
        _
      $region10: #{tpu_custom_call.1} parent=5 // pred_check_branch
        %173 = sbr.rel (%p170) target = $region12
      $region11: #{tpu_custom_call.1} parent=5 // pred_region
        %s174 = ssub.s32 %s16, 1
        // Predicated region
        $region13: #{tpu_custom_call.1} parent=11 // pred_check
          %p175 = pneg %p80
        $region14: #{tpu_custom_call.1} parent=11 // pred_check_branch
          %177 = sbr.rel (%p175) target = $region16
        $region15: #{tpu_custom_call.1} parent=11 // pred_region
          %p178 = scmp.lt.s32.totalorder %s26, 0
          %s179 = scalar_select %p178, %s26, 0
          %s180 = scalar_lea.vmem %s1, %s179
        $region16: #{tpu_custom_call.1} parent=11 // pred_fallthru
          _
        // Predicated region
        $region17: #{tpu_custom_call.1} parent=11 // pred_check
          %p181 = pneg %p134
        $region18: #{tpu_custom_call.1} parent=11 // pred_check_branch
          %183 = sbr.rel (%p181) target = $region20
        $region19: #{tpu_custom_call.1} parent=11 // pred_region
          %s184 = smul.u32 16, %s26
          %p185 = scmp.lt.s32.totalorder %s184, 15
          %s186 = scalar_select %p185, %s184, 15
          %s187 = smul.addr %s186, 4
          %s188 = scalar_lea.vmem %s3, %s187
          %s189 = smul.u32 16, %s26
        $region20: #{tpu_custom_call.1} parent=11 // pred_fallthru
          _
      $region12: #{tpu_custom_call.1} parent=5 // pred_fallthru
        _
      %p190 = scmp.lt.s32.totalorder %s16, 2
      // Predicated region
      $region21: #{tpu_custom_call.1} parent=5 // pred_check
        %p191 = pneg %p190
      $region22: #{tpu_custom_call.1} parent=5 // pred_check_branch
        %193 = sbr.rel (%p191) target = $region24
      $region23: #{tpu_custom_call.1} parent=5 // pred_region
        // Predicated region
        $region25: #{tpu_custom_call.1} parent=23 // pred_check
          %p194 = pneg %p48
        $region26: #{tpu_custom_call.1} parent=23 // pred_check_branch
          %196 = sbr.rel (%p194) target = $region28
        $region27: #{tpu_custom_call.1} parent=23 // pred_region
          %s197 = smul.u32 4, %s23
          %p198 = scmp.lt.s32.totalorder %s197, 7
          %s199 = scalar_select %p198, %s197, 7
          %s200 = smul.addr %s199, 8
          %s201 = scalar_lea.vmem %s0, %s200
          %s202 = smul.u32 4, %s23
        $region28: #{tpu_custom_call.1} parent=23 // pred_fallthru
          _
        // Predicated region
        $region29: #{tpu_custom_call.1} parent=23 // pred_check
          %p203 = pneg %p102
        $region30: #{tpu_custom_call.1} parent=23 // pred_check_branch
          %205 = sbr.rel (%p203) target = $region32
        $region31: #{tpu_custom_call.1} parent=23 // pred_region
          %s206 = sand.u32 %s92, 1
          %s207 = scalar_lea.sflag [#allocation6], %s206
          %s208 = sand.u32 %s92, 1
          %s209 = smul.addr %s208, 16
          %s210 = scalar_lea.vmem [#allocation5], %s209
          %s211 = smul.u32 4, %s23
          %213 = vsyncadd %s207, 0
          %s214 = sadd.s32 %s24, %s211
          %s215 = smul.addr %s214, 4
          %s216 = scalar_lea.hbm %s2, %s215
          %s217 = sshll.u32 %s216, 4
          %s218 = int_to_ptr.hbm [resolvable:$true] %s217
          %s219 = sshll.u32 %s210, 4
          %s220 = int_to_ptr.vmem [resolvable:$true] %s219
          %225 = dma.hbm_to_vmem [thread:$0]  %s218, 256, %s220, %s207, 64, 64, 4
        $region32: #{tpu_custom_call.1} parent=23 // pred_fallthru
          _
      $region24: #{tpu_custom_call.1} parent=5 // pred_fallthru
        _
      %p226 = scmp.le.s32.totalorder 1, %s16
      %p227 = scmp.lt.s32.totalorder %s16, 3
      %p228 = pnand %p226, %p227
      %p229 = pneg %p228
      // Predicated region
      $region33: #{tpu_custom_call.1} parent=5 // pred_check
        _
      $region34: #{tpu_custom_call.1} parent=5 // pred_check_branch
        %231 = sbr.rel (%p228) target = $region36
      $region35: #{tpu_custom_call.1} parent=5 // pred_region
        %s232 = ssub.s32 %s16, 1
        %s233 = sand.u32 %s95, 1
        %s234 = scalar_lea.sflag [#allocation6], %s233
        %s235 = sand.u32 %s95, 1
        %s236 = smul.addr %s235, 16
        %s237 = scalar_lea.vmem [#allocation5], %s236
        // Predicated region
        $region37: #{tpu_custom_call.1} parent=35 // pred_check
          %p238 = pneg %p108
        $region38: #{tpu_custom_call.1} parent=35 // pred_check_branch
          %240 = sbr.rel (%p238) target = $region40
        $region39: #{tpu_custom_call.1} parent=35 // pred_region
          %242 = dma.done %s234, 256
        $region40: #{tpu_custom_call.1} parent=35 // pred_fallthru
          _
        %s243 = smul.u32 4, %s25
        %p244 = scmp.lt.s32.totalorder %s243, 7
        %s245 = scalar_select %p244, %s243, 7
        %s246 = smul.addr %s245, 8
        %s247 = scalar_lea.vmem %s0, %s246
        %p248 = pneg %p54
        %p249 = pneg %p51
        %p250 = scmp.lt.s32.totalorder %s26, 0
        %s251 = scalar_select %p250, %s26, 0
        %s252 = scalar_lea.vmem %s1, %s251
        %p253 = pneg %p80
        %p254 = pneg %p77
        %s255 = sand.u32 %s95, 1
        %s256 = scalar_lea.sflag [#allocation6], %s255
        %s257 = sand.u32 %s95, 1
        %s258 = smul.addr %s257, 16
        %s259 = scalar_lea.vmem [#allocation5], %s258
        %p260 = pneg %p108
        %p261 = pneg %p105
        %s262 = smul.u32 16, %s26
        %p263 = scmp.lt.s32.totalorder %s262, 15
        %s264 = scalar_select %p263, %s262, 15
        %s265 = smul.addr %s264, 4
        %s266 = scalar_lea.vmem %s3, %s265
        %p267 = pneg %p134
        %p268 = pneg %p131
        %p269 = pneg %p160
        %p270 = pneg %p157
        %s271 = sand.u32 %s147, 1
        %s272 = scalar_lea.sflag [#allocation7], %s271
        %s273 = sand.u32 %s147, 1
        %s274 = smul.addr %s273, 32
        %s275 = scalar_lea.vmem [#allocation8], %s274
        %s276 = smul.u32 4, %s25
        %p277 = scmp.lt.s32.totalorder %s276, 7
        %s278 = scalar_select %p277, %s276, 7
        %s279 = smul.addr %s278, 8
        %s280 = scalar_lea.vmem %s0, %s279
        %s281 = smul.u32 4, %s25
        %p282 = scmp.lt.s32.totalorder %s26, 0
        %s283 = scalar_select %p282, %s26, 0
        %s284 = scalar_lea.vmem %s1, %s283
        %s285 = smul.u32 4, %s25
        %s286 = smul.u32 16, %s26
        %p287 = scmp.lt.s32.totalorder %s286, 15
        %s288 = scalar_select %p287, %s286, 15
        %s289 = smul.addr %s288, 4
        %s290 = scalar_lea.vmem %s3, %s289
        %s291 = smul.u32 16, %s26
        %s292 = smul.u32 4, %s25
        %p293 = scmp.eq.s32.totalorder %s26, 0
        // Predicated region
        $region41: #{tpu_custom_call.1} parent=35 // pred_check
          %p294 = pneg %p293
        $region42: #{tpu_custom_call.1} parent=35 // pred_check_branch
          %296 = sbr.rel (%p294) target = $region44
        $region43: #{tpu_custom_call.1} parent=35 // pred_region
          %vm297 = vcmask 7168
          %298 = vst.msk [vmem:[#allocation2] sm:$0xff] %vm297, -inf
          %299 = vst.msk [vmem:[#allocation2 + $0x8] sm:$0xff] %vm297, -inf
          %300 = vst.msk [vmem:[#allocation2 + $0x10] sm:$0xff] %vm297, -inf
          %301 = vst.msk [vmem:[#allocation2 + $0x18] sm:$0xff] %vm297, -inf
          %302 = vst.msk [vmem:[#allocation3] sm:$0xff] %vm297, 0.0
          %303 = vst.msk [vmem:[#allocation3 + $0x8] sm:$0xff] %vm297, 0.0
          %304 = vst.msk [vmem:[#allocation3 + $0x10] sm:$0xff] %vm297, 0.0
          %305 = vst.msk [vmem:[#allocation3 + $0x18] sm:$0xff] %vm297, 0.0
          %306 = vst [vmem:[#allocation4] sm:$0xff] 0.0
          %307 = vst [vmem:[#allocation4 + $0x8] sm:$0xff] 0.0
          %308 = vst [vmem:[#allocation4 + $0x10] sm:$0xff] 0.0
          %309 = vst [vmem:[#allocation4 + $0x18] sm:$0xff] 0.0
        $region44: #{tpu_custom_call.1} parent=35 // pred_fallthru
          _
        %v310 = vld [vmem:[%s280] sm:$0xff]
        %v311 = vld [vmem:[%s280 + $0x8] sm:$0xff]
        %v312 = vld [vmem:[%s280 + $0x10] sm:$0xff]
        %v313 = vld [vmem:[%s280 + $0x18] sm:$0xff]
        %v314 = vld [vmem:[%s284] sm:$0x1]
        %316 = vset.pattern.permute.xlu0 0
        %317 = vperm.xlu0 %316, %v310
        %v318 = vpop.permute.xlu0 %317
        %321 = vset.pattern.permute.xlu0 0
        %322 = vperm.xlu0 %321, %v311
        %v323 = vpop.permute.xlu0 %322
        %326 = vset.pattern.permute.xlu0 0
        %327 = vperm.xlu0 %326, %v312
        %v328 = vpop.permute.xlu0 %327
        %331 = vset.pattern.permute.xlu0 0
        %332 = vperm.xlu0 %331, %v313
        %v333 = vpop.permute.xlu0 %332
        %v336 = vperm.slane %v314, 0
        %v338 = vadd.f32 %v318, %v336
        %v339 = vadd.f32 %v323, %v336
        %v340 = vadd.f32 %v328, %v336
        %v341 = vadd.f32 %v333, %v336
        %vm342 = vcmp.gt.f32.partialorder %v338, 0.0
        %vm343 = vcmp.gt.f32.partialorder %v339, 0.0
        %vm344 = vcmp.gt.f32.partialorder %v340, 0.0
        %vm345 = vcmp.gt.f32.partialorder %v341, 0.0
        %v346 = vmul.f32 %v338, 0.2
        %v347 = vmul.f32 %v339, 0.2
        %v348 = vmul.f32 %v340, 0.2
        %v349 = vmul.f32 %v341, 0.2
        %v350 = vsel %vm342, %v338, %v346
        %v351 = vsel %vm343, %v339, %v347
        %v352 = vsel %vm344, %v340, %v348
        %v353 = vsel %vm345, %v341, %v349
        %v354 = vld [vmem:[%s237] sm:$0xf]
        %v355 = vld [vmem:[%s237 + $0x4] sm:$0xf]
        %v356 = vld [vmem:[%s237 + $0x8] sm:$0xf]
        %v357 = vld [vmem:[%s237 + $0xc] sm:$0xf]
        %v358 = vunpack.c.l.bf16 %v354
        %v359 = vunpack.c.l.bf16 %v355
        %v360 = vunpack.c.l.bf16 %v356
        %v361 = vunpack.c.l.bf16 %v357
        %v362 = vadd.f32 %v350, %v358
        %v363 = vadd.f32 %v351, %v359
        %v364 = vadd.f32 %v352, %v360
        %v365 = vadd.f32 %v353, %v361
        %v366 = vld [vmem:[#allocation2] sm:$0xff]
        %v367 = vld [vmem:[#allocation2 + $0x8] sm:$0xff]
        %v368 = vld [vmem:[#allocation2 + $0x10] sm:$0xff]
        %v369 = vld [vmem:[#allocation2 + $0x18] sm:$0xff]
        %370 = vmax.xlane.f32.xlu0 %v362
        %v371 = vpop.xlane.xlu0 %370
        %372 = vmax.xlane.f32.xlu0 %v363
        %v373 = vpop.xlane.xlu0 %372
        %374 = vmax.xlane.f32.xlu0 %v364
        %v375 = vpop.xlane.xlu0 %374
        %376 = vmax.xlane.f32.xlu0 %v365
        %v377 = vpop.xlane.xlu0 %376
        %v378 = vmax.f32 %v366, %v371
        %v379 = vmax.f32 %v367, %v373
        %v380 = vmax.f32 %v368, %v375
        %v381 = vmax.f32 %v369, %v377
        %v382 = vsub.f32 %v366, %v378
        %v383 = vsub.f32 %v367, %v379
        %v384 = vsub.f32 %v368, %v380
        %v385 = vsub.f32 %v369, %v381
        %v386 = vmul.f32 %v382, 1.442695
        %v387 = vpow.pop %v386
        %v388 = vmul.f32 %v383, 1.442695
        %v389 = vpow.pop %v388
        %v390 = vmul.f32 %v384, 1.442695
        %v391 = vpow.pop %v390
        %v392 = vmul.f32 %v385, 1.442695
        %v393 = vpow.pop %v392
        %395 = vset.pattern.permute.xlu0 0
        %396 = vperm.xlu0 %395, %v378
        %v397 = vpop.permute.xlu0 %396
        %400 = vset.pattern.permute.xlu0 0
        %401 = vperm.xlu0 %400, %v379
        %v402 = vpop.permute.xlu0 %401
        %405 = vset.pattern.permute.xlu0 0
        %406 = vperm.xlu0 %405, %v380
        %v407 = vpop.permute.xlu0 %406
        %410 = vset.pattern.permute.xlu0 0
        %411 = vperm.xlu0 %410, %v381
        %v412 = vpop.permute.xlu0 %411
        %v414 = vsub.f32 %v362, %v397
        %v415 = vsub.f32 %v363, %v402
        %v416 = vsub.f32 %v364, %v407
        %v417 = vsub.f32 %v365, %v412
        %v418 = vmul.f32 %v414, 1.442695
        %v419 = vpow.pop %v418
        %v420 = vmul.f32 %v415, 1.442695
        %v421 = vpow.pop %v420
        %v422 = vmul.f32 %v416, 1.442695
        %v423 = vpow.pop %v422
        %v424 = vmul.f32 %v417, 1.442695
        %v425 = vpow.pop %v424
        %v426 = vld [vmem:[#allocation3] sm:$0xff]
        %v427 = vld [vmem:[#allocation3 + $0x8] sm:$0xff]
        %v428 = vld [vmem:[#allocation3 + $0x10] sm:$0xff]
        %v429 = vld [vmem:[#allocation3 + $0x18] sm:$0xff]
        %v430 = vmul.f32 %v387, %v426
        %v431 = vmul.f32 %v389, %v427
        %v432 = vmul.f32 %v391, %v428
        %v433 = vmul.f32 %v393, %v429
        %434 = vadd.xlane.f32.xlu0 %v419
        %v435 = vpop.xlane.xlu0 %434
        %436 = vadd.xlane.f32.xlu0 %v421
        %v437 = vpop.xlane.xlu0 %436
        %438 = vadd.xlane.f32.xlu0 %v423
        %v439 = vpop.xlane.xlu0 %438
        %440 = vadd.xlane.f32.xlu0 %v425
        %v441 = vpop.xlane.xlu0 %440
        %v442 = vadd.f32 %v430, %v435
        %v443 = vadd.f32 %v431, %v437
        %v444 = vadd.f32 %v432, %v439
        %v445 = vadd.f32 %v433, %v441
        %vm446 = vcmask 7168
        %447 = vst.msk [vmem:[#allocation3] sm:$0xff] %vm446, %v442
        %448 = vst.msk [vmem:[#allocation3 + $0x8] sm:$0xff] %vm446, %v443
        %449 = vst.msk [vmem:[#allocation3 + $0x10] sm:$0xff] %vm446, %v444
        %450 = vst.msk [vmem:[#allocation3 + $0x18] sm:$0xff] %vm446, %v445
        %v451 = vld [vmem:[#allocation4] sm:$0xff]
        %v452 = vld [vmem:[#allocation4 + $0x8] sm:$0xff]
        %v453 = vld [vmem:[#allocation4 + $0x10] sm:$0xff]
        %v454 = vld [vmem:[#allocation4 + $0x18] sm:$0xff]
        %456 = vset.pattern.permute.xlu0 0
        %457 = vperm.xlu0 %456, %v387
        %v458 = vpop.permute.xlu0 %457
        %461 = vset.pattern.permute.xlu0 0
        %462 = vperm.xlu0 %461, %v389
        %v463 = vpop.permute.xlu0 %462
        %466 = vset.pattern.permute.xlu0 0
        %467 = vperm.xlu0 %466, %v391
        %v468 = vpop.permute.xlu0 %467
        %471 = vset.pattern.permute.xlu0 0
        %472 = vperm.xlu0 %471, %v393
        %v473 = vpop.permute.xlu0 %472
        %v475 = vmul.f32 %v458, %v451
        %v476 = vmul.f32 %v463, %v452
        %v477 = vmul.f32 %v468, %v453
        %v478 = vmul.f32 %v473, %v454
        %v479 = vpack.c.bf16 %v421, %v419
        %v480 = vpack.c.bf16 %v425, %v423
        %v481 = vld [vmem:[%s290] sm:$0xf]
        %v482 = vld [vmem:[%s290 + $0x4] sm:$0xf]
        %v483 = vld [vmem:[%s290 + $0x8] sm:$0xf]
        %v484 = vld [vmem:[%s290 + $0xc] sm:$0xf]
        %v485 = vld [vmem:[%s290 + $0x10] sm:$0xf]
        %v486 = vld [vmem:[%s290 + $0x14] sm:$0xf]
        %v487 = vld [vmem:[%s290 + $0x18] sm:$0xf]
        %v488 = vld [vmem:[%s290 + $0x1c] sm:$0xf]
        %v489 = vld [vmem:[%s290 + $0x20] sm:$0xf]
        %v490 = vld [vmem:[%s290 + $0x24] sm:$0xf]
        %v491 = vld [vmem:[%s290 + $0x28] sm:$0xf]
        %v492 = vld [vmem:[%s290 + $0x2c] sm:$0xf]
        %v493 = vld [vmem:[%s290 + $0x30] sm:$0xf]
        %v494 = vld [vmem:[%s290 + $0x34] sm:$0xf]
        %v495 = vld [vmem:[%s290 + $0x38] sm:$0xf]
        %v496 = vld [vmem:[%s290 + $0x3c] sm:$0xf]
        %v513 = vunpack.c.l.b16 %v481
        %v514 = vunpack.c.l.b16 %v482
        %v515 = vunpack.c.l.b16 %v483
        %v516 = vunpack.c.l.b16 %v484
        %v517 = vunpack.c.l.b16 %v485
        %v518 = vunpack.c.l.b16 %v486
        %v519 = vunpack.c.l.b16 %v487
        %v520 = vunpack.c.l.b16 %v488
        %v521 = vunpack.c.l.b16 %v489
        %v522 = vunpack.c.l.b16 %v490
        %v523 = vunpack.c.l.b16 %v491
        %v524 = vunpack.c.l.b16 %v492
        %v525 = vunpack.c.l.b16 %v493
        %v526 = vunpack.c.l.b16 %v494
        %v527 = vunpack.c.l.b16 %v495
        %v528 = vunpack.c.l.b16 %v496
        %v529 = vpack.c.b16 %v514, %v513
        %v530 = vpack.c.b16 %v516, %v515
        %v531 = vpack.c.b16 %v518, %v517
        %v532 = vpack.c.b16 %v520, %v519
        %v533 = vpack.c.b16 %v522, %v521
        %v534 = vpack.c.b16 %v524, %v523
        %v535 = vpack.c.b16 %v526, %v525
        %v536 = vpack.c.b16 %v528, %v527
        %545 = vmatpush.bf16.msra.mxu0 %v536
        %546 = vmatpush.bf16.msra.mxu0 %v535
        %547 = vmatpush.bf16.msra.mxu0 %v534
        %548 = vmatpush.bf16.msra.mxu0 %v533
        %549 = vmatpush.bf16.msra.mxu0 %v532
        %550 = vmatpush.bf16.msra.mxu0 %v531
        %551 = vmatpush.bf16.msra.mxu0 %v530
        %552 = vmatpush.bf16.msra.mxu0 %v529
        %553 = vmatmul.bf16.gmra.mxu0 %v479
        %v554 = vpop.f32.mrf.mxu0
        %v555 = vadd.f32 0.0, %v554
        %v556 = vpop.f32.mrf.mxu0
        %v557 = vadd.f32 0.0, %v556
        %558 = vmatmul.bf16.gmra.mxu0 %v480
        %v559 = vpop.f32.mrf.mxu0
        %v560 = vadd.f32 0.0, %v559
        %v561 = vpop.f32.mrf.mxu0
        %v562 = vadd.f32 0.0, %v561
        %563 = vdwg.mxu0
        %v564 = vadd.f32 %v475, %v555
        %v565 = vadd.f32 %v476, %v557
        %v566 = vadd.f32 %v477, %v560
        %v567 = vadd.f32 %v478, %v562
        %568 = vst [vmem:[#allocation4] sm:$0xff] %v564
        %569 = vst [vmem:[#allocation4 + $0x8] sm:$0xff] %v565
        %570 = vst [vmem:[#allocation4 + $0x10] sm:$0xff] %v566
        %571 = vst [vmem:[#allocation4 + $0x18] sm:$0xff] %v567
        %572 = vst.msk [vmem:[#allocation2] sm:$0xff] %vm446, %v378
        %573 = vst.msk [vmem:[#allocation2 + $0x8] sm:$0xff] %vm446, %v379
        %574 = vst.msk [vmem:[#allocation2 + $0x10] sm:$0xff] %vm446, %v380
        %575 = vst.msk [vmem:[#allocation2 + $0x18] sm:$0xff] %vm446, %v381
        // Predicated region
        $region45: #{tpu_custom_call.1} parent=35 // pred_check
          %p576 = pneg %p293
        $region46: #{tpu_custom_call.1} parent=35 // pred_check_branch
          %578 = sbr.rel (%p576) target = $region48
        $region47: #{tpu_custom_call.1} parent=35 // pred_region
          %v579 = vld [vmem:[#allocation3] sm:$0xff]
          %v580 = vld [vmem:[#allocation3 + $0x8] sm:$0xff]
          %v581 = vld [vmem:[#allocation3 + $0x10] sm:$0xff]
          %v582 = vld [vmem:[#allocation3 + $0x18] sm:$0xff]
          %v583 = vrcp.pop %v579
          %v584 = vrcp.pop %v580
          %v585 = vrcp.pop %v581
          %v586 = vrcp.pop %v582
          %v587 = vld [vmem:[#allocation4] sm:$0xff]
          %v588 = vld [vmem:[#allocation4 + $0x8] sm:$0xff]
          %v589 = vld [vmem:[#allocation4 + $0x10] sm:$0xff]
          %v590 = vld [vmem:[#allocation4 + $0x18] sm:$0xff]
          %592 = vset.pattern.permute.xlu0 0
          %593 = vperm.xlu0 %592, %v583
          %v594 = vpop.permute.xlu0 %593
          %597 = vset.pattern.permute.xlu0 0
          %598 = vperm.xlu0 %597, %v584
          %v599 = vpop.permute.xlu0 %598
          %602 = vset.pattern.permute.xlu0 0
          %603 = vperm.xlu0 %602, %v585
          %v604 = vpop.permute.xlu0 %603
          %607 = vset.pattern.permute.xlu0 0
          %608 = vperm.xlu0 %607, %v586
          %v609 = vpop.permute.xlu0 %608
          %v611 = vmul.f32 %v587, %v594
          %v612 = vmul.f32 %v588, %v599
          %v613 = vmul.f32 %v589, %v604
          %v614 = vmul.f32 %v590, %v609
          %vm615 = vcmp.gt.f32.partialorder %v611, 0.0
          %vm616 = vcmp.gt.f32.partialorder %v612, 0.0
          %vm617 = vcmp.gt.f32.partialorder %v613, 0.0
          %vm618 = vcmp.gt.f32.partialorder %v614, 0.0
          %v619 = vmin.f32 %v611, 0.0
          %v620 = vmin.f32 %v612, 0.0
          %v621 = vmin.f32 %v613, 0.0
          %v622 = vmin.f32 %v614, 0.0
          %v623 = vmul.f32 %v619, 1.442695
          %v624 = vpow.pop %v623
          %v625 = vmul.f32 %v620, 1.442695
          %v626 = vpow.pop %v625
          %v627 = vmul.f32 %v621, 1.442695
          %v628 = vpow.pop %v627
          %v629 = vmul.f32 %v622, 1.442695
          %v630 = vpow.pop %v629
          %v631 = vsub.f32 %v624, 1.0
          %v632 = vsub.f32 %v626, 1.0
          %v633 = vsub.f32 %v628, 1.0
          %v634 = vsub.f32 %v630, 1.0
          %v635 = vsel %vm615, %v611, %v631
          %v636 = vsel %vm616, %v612, %v632
          %v637 = vsel %vm617, %v613, %v633
          %v638 = vsel %vm618, %v614, %v634
          %639 = vst [vmem:[%s275] sm:$0xff] %v635
          %640 = vst [vmem:[%s275 + $0x8] sm:$0xff] %v636
          %641 = vst [vmem:[%s275 + $0x10] sm:$0xff] %v637
          %642 = vst [vmem:[%s275 + $0x18] sm:$0xff] %v638
        $region48: #{tpu_custom_call.1} parent=35 // pred_fallthru
          _
        %s643 = sand.u32 %s147, 1
        %s644 = scalar_lea.sflag [#allocation7], %s643
        %s645 = sand.u32 %s147, 1
        %s646 = smul.addr %s645, 32
        %s647 = scalar_lea.vmem [#allocation8], %s646
        // Predicated region
        $region49: #{tpu_custom_call.1} parent=35 // pred_check
          %p648 = pneg %p157
        $region50: #{tpu_custom_call.1} parent=35 // pred_check_branch
          %650 = sbr.rel (%p648) target = $region52
        $region51: #{tpu_custom_call.1} parent=35 // pred_region
          %s651 = smul.u32 4, %s25
          %653 = vsyncadd %s644, 0
          %s654 = smul.addr %s651, 8
          %s655 = scalar_lea.hbm %s4, %s654
          %s656 = sshll.u32 %s647, 4
          %s657 = int_to_ptr.vmem [resolvable:$true] %s656
          %s658 = sshll.u32 %s655, 4
          %s659 = int_to_ptr.hbm [resolvable:$true] %s658
          %664 = dma.vmem_to_hbm [thread:$0]  %s657, 512, %s659, %s644, 128, 128, 8
        $region52: #{tpu_custom_call.1} parent=35 // pred_fallthru
          _
      $region36: #{tpu_custom_call.1} parent=5 // pred_fallthru
        _
      %p665 = scmp.le.s32.totalorder 2, %s16
      // Predicated region
      $region53: #{tpu_custom_call.1} parent=5 // pred_check
        %p666 = pneg %p665
      $region54: #{tpu_custom_call.1} parent=5 // pred_check_branch
        %668 = sbr.rel (%p666) target = $region56
      $region55: #{tpu_custom_call.1} parent=5 // pred_region
        %s669 = ssub.s32 %s16, 2
        // Predicated region
        $region57: #{tpu_custom_call.1} parent=55 // pred_check
          %p670 = pneg %p163
        $region58: #{tpu_custom_call.1} parent=55 // pred_check_branch
          %672 = sbr.rel (%p670) target = $region60
        $region59: #{tpu_custom_call.1} parent=55 // pred_region
          %s673 = sand.u32 %s148, 1
          %s674 = scalar_lea.sflag [#allocation7], %s673
          %s675 = sand.u32 %s148, 1
          %s676 = smul.addr %s675, 32
          %s677 = scalar_lea.vmem [#allocation8], %s676
          %679 = dma.done %s674, 512
        $region60: #{tpu_custom_call.1} parent=55 // pred_fallthru
          _
      $region56: #{tpu_custom_call.1} parent=5 // pred_fallthru
        _
    $region6: #{tpu_custom_call.1} parent=1 // loop_footer
      %s20 = sadd.s32 1, %s16
    $region7: #{tpu_custom_call.1} parent=1 // loop_footer_branch
      %15 = sbr.rel target = $region3
    $region8: #{tpu_custom_call.1} parent=1 // loop_exit
      _
    %680 = vsyncpa [#allocation6], 1
    %s681 = scalar_lea.sflag [#allocation6], 1
    %682 = vsyncpa %s681, 1
    %683 = vsyncpa [#allocation7], 1
    %s684 = scalar_lea.sflag [#allocation7], 1
    %685 = vsyncpa %s684, 1

</llo_original>
